<compile_context>
chip_gen: v7x
topology: tpu7x:2x2x1
jax: 0.10.0
libtpu: 0.0.40
codegen_flags: <defaults>
</compile_context>

<pallas_src>
import functools

import jax
import jax.numpy as jnp
from jax.experimental import pallas as pl
from jax.experimental.pallas import tpu as pltpu


# Past ~1K rows per tile the ~0.35us per-grid-step overhead is fully
# amortized (85%+ of HBM roofline already at 512-1024 rows); keeping tiles
# <= 1024 also leaves >= 2 grid steps for mid-sized batches so v7x can use
# both TensorCores.
_MAX_TB = 1024


def _round_up(x, m):
    return ((x + m - 1) // m) * m


def _vmem_budgets():
    """Per-generation VMEM sizing.

    Returns (input_budget_bytes, vmem_limit_bytes) where the input budget
    bounds 3 inputs x 2 pipeline buffers x TB x D x itemsize.
    """
    try:
        cap = int(pltpu.get_tpu_info().vmem_capacity_bytes)
    except Exception:
        cap = 64 * 1024 * 1024  # conservative: assume v7x-sized VMEM
    # v7x (64 MiB):  limit 32 MiB, input budget 24 MiB
    # v5e/v6e (128): limit 64 MiB, input budget 48 MiB
    limit = min(cap // 2, 96 * 1024 * 1024)
    input_budget = (limit * 3) // 4
    return input_budget, limit


def _triplet_loss_kernel(a_ref, p_ref, n_ref, loss_ref, *, margin, tb, batch):
    """One (TB, D) tile of the batch -> per-row losses (TB, 1) in f32."""
    i = pl.program_id(0)

    # Upcast in-vreg (inputs may be bf16/fp16); math in f32 for accuracy.
    a = a_ref[...].astype(jnp.float32)
    p = p_ref[...].astype(jnp.float32)
    n = n_ref[...].astype(jnp.float32)

    # distance_positive = (anchor - positive).pow(2).sum(1)
    # distance_negative = (anchor - negative).pow(2).sum(1)
    # Keep reductions 2-D ((TB, 1), keepdims) to stay in native
    # (sublane, lane) vreg layout.
    dpos = a - p
    dneg = a - n
    dist_pos = jnp.sum(dpos * dpos, axis=1, keepdims=True)   # (TB, 1)
    dist_neg = jnp.sum(dneg * dneg, axis=1, keepdims=True)   # (TB, 1)

    # losses = relu(dp - dn + margin)
    losses = jnp.maximum(dist_pos - dist_neg + margin, 0.0)  # (TB, 1)

    is_last = i == pl.num_programs(0) - 1

    # Interior tiles are always fully in-bounds: skip the mask entirely.
    @pl.when(jnp.logical_not(is_last))
    def _():
        loss_ref[...] = losses

    # Last tile may overhang the batch (B not a multiple of TB): the
    # overhang rows contain unspecified data, so mask them to 0 AFTER the
    # loss computation (jnp.where selects 0 even if losses there are NaN).
    @pl.when(is_last)
    def _():
        row = i * tb + jax.lax.broadcasted_iota(jnp.int32, (tb, 1), 0)
        loss_ref[...] = jnp.where(row < batch, losses, 0.0)


def triplet_loss(anchor, positive, negative, *, margin, size_average=True):
    """Pallas TPU implementation of TripletLoss.forward.

    anchor, positive, negative: (B, D) arrays (f32 / bf16 / fp16).
    Returns a scalar float32.
    """
    assert anchor.shape == positive.shape == negative.shape
    assert anchor.dtype == positive.dtype == negative.dtype
    assert anchor.ndim == 2
    B, D = anchor.shape

    itemsize = jnp.dtype(anchor.dtype).itemsize
    # Sublane packing alignment: 8 rows for 32-bit, 16 for 16-bit dtypes.
    align = max(8, 32 // itemsize)

    input_budget, vmem_limit = _vmem_budgets()

    # Batch-tile size: largest aligned count fitting the double-buffered
    # 3-input VMEM budget, capped at _MAX_TB, never larger than (aligned) B.
    bytes_per_row = D * itemsize
    tb_fit = max(align, (input_budget // (3 * 2 * bytes_per_row)) // align * align)
    tb = min(_round_up(B, align), tb_fit, _MAX_TB)
    # TODO(synk): add a D-tiling path (2nd grid axis + f32 accumulator) for
    # extremely wide embeddings where even `align` rows over full D exceed VMEM.

    # Give v7x's two TensorCores something to shard: ensure >= 2 grid steps
    # whenever the batch allows it (512+ row tiles already hit ~85% of the
    # HBM roofline, so splitting costs essentially nothing).
    if pl.cdiv(B, tb) < 2 and B > align:
        tb = _round_up(pl.cdiv(B, 2), align)

    num_tiles = pl.cdiv(B, tb)
    out_rows = num_tiles * tb  # padded output only; Pallas allocates it for free

    kernel = functools.partial(
        _triplet_loss_kernel, margin=float(margin), tb=tb, batch=B
    )

    # D stays the full last dim of the block (lane axis). Inputs are NOT
    # padded or up-cast in the wrapper: the ragged last batch block is
    # handled by Pallas boundary semantics + the in-kernel mask.
    in_spec = pl.BlockSpec((tb, D), lambda i: (i, 0))

    losses = pl.pallas_call(
        kernel,
        out_shape=jax.ShapeDtypeStruct((out_rows, 1), jnp.float32),
        grid_spec=pltpu.PrefetchScalarGridSpec(
            num_scalar_prefetch=0,
            grid=(num_tiles,),
            in_specs=[in_spec, in_spec, in_spec],
            out_specs=pl.BlockSpec((tb, 1), lambda i: (i, 0)),
        ),
        compiler_params=pltpu.CompilerParams(
            # Independent per-tile outputs: the batch axis can shard across
            # both TensorCores on v7x; harmless on v5e/v6e.
            dimension_semantics=("parallel",),
            vmem_limit_bytes=vmem_limit,
        ),
    )(anchor, positive, negative)

    total = jnp.sum(losses)  # tiny (num_tiles*tb, 1) reduction, done by XLA
    return total / B if size_average else total


def _triplet_loss_ref(anchor, positive, negative, margin, size_average=True):
    a = anchor.astype(jnp.float32)
    p = positive.astype(jnp.float32)
    n = negative.astype(jnp.float32)
    dp = jnp.sum((a - p) ** 2, axis=1)
    dn = jnp.sum((a - n) ** 2, axis=1)
    losses = jnp.maximum(dp - dn + margin, 0.0)
    return jnp.mean(losses) if size_average else jnp.sum(losses)


if __name__ == "__main__":
    key = jax.random.PRNGKey(0)
    k_a, k_p, k_n = jax.random.split(key, 3)

    B, D = 8, 32          # small shapes: batch of 8 embeddings, dim 32
    margin = 1.0

    anchor = jax.random.normal(k_a, (B, D), dtype=jnp.float32)
    positive = jax.random.normal(k_p, (B, D), dtype=jnp.float32)
    negative = jax.random.normal(k_n, (B, D), dtype=jnp.float32)

    out = triplet_loss(anchor, positive, negative, margin=margin, size_average=True)
    out = jax.block_until_ready(out)
    ref = _triplet_loss_ref(anchor, positive, negative, margin, True)
    assert jnp.allclose(out, ref, rtol=1e-5, atol=1e-5), (out, ref)

    # sum-reduction path
    out_sum = jax.block_until_ready(
        triplet_loss(anchor, positive, negative, margin=margin, size_average=False)
    )
    ref_sum = _triplet_loss_ref(anchor, positive, negative, margin, False)
    assert jnp.allclose(out_sum, ref_sum, rtol=1e-5, atol=1e-5), (out_sum, ref_sum)

    # batch not a multiple of the tile: exercises the no-pad ragged-block
    # path (last block overhangs the array; in-kernel mask zeroes it).
    B2 = 13
    a2 = jax.random.normal(k_a, (B2, D), dtype=jnp.float32)
    p2 = jax.random.normal(k_p, (B2, D), dtype=jnp.float32)
    n2 = jax.random.normal(k_n, (B2, D), dtype=jnp.float32)
    out2 = jax.block_until_ready(
        triplet_loss(a2, p2, n2, margin=margin, size_average=True)
    )
    ref2 = _triplet_loss_ref(a2, p2, n2, margin, True)
    assert jnp.allclose(out2, ref2, rtol=1e-5, atol=1e-5), (out2, ref2)

    # bf16 inputs streamed natively (no wrapper astype); math in f32 in-kernel.
    B3 = 16
    a3 = jax.random.normal(k_a, (B3, D), dtype=jnp.float32).astype(jnp.bfloat16)
    p3 = jax.random.normal(k_p, (B3, D), dtype=jnp.float32).astype(jnp.bfloat16)
    n3 = jax.random.normal(k_n, (B3, D), dtype=jnp.float32).astype(jnp.bfloat16)
    out3 = jax.block_until_ready(
        triplet_loss(a3, p3, n3, margin=margin, size_average=True)
    )
    ref3 = _triplet_loss_ref(a3, p3, n3, margin, True)
    assert jnp.allclose(out3, ref3, rtol=2e-2, atol=2e-2), (out3, ref3)

    print("KERNEL_OK")
</pallas_src>

<mosaic_0001>
module attributes {stable_mosaic.version = 11 : i64} {
  func.func @_triplet_loss_kernel(%arg0: i32, %arg1: memref<8x32xf32, #tpu.memory_space<vmem>>, %arg2: memref<8x32xf32, #tpu.memory_space<vmem>>, %arg3: memref<8x32xf32, #tpu.memory_space<vmem>>, %arg4: memref<8x1xf32, #tpu.memory_space<vmem>>) attributes {dimension_semantics = [#tpu.dimension_semantics<parallel>], iteration_bounds = array<i64: 1>, scalar_prefetch = 0 : i64, scratch_operands = 0 : i64, tpu.core_type = #tpu.core_type<tc>, window_params = [{transform_indices = @transform_0, window_bounds = array<i64: 8, 32>}, {transform_indices = @transform_1, window_bounds = array<i64: 8, 32>}, {transform_indices = @transform_2, window_bounds = array<i64: 8, 32>}, {transform_indices = @transform_3, window_bounds = array<i64: 8, 1>}]} {
    %c0 = arith.constant 0 : index
    %c0_0 = arith.constant 0 : index
    %0 = vector.load %arg1[%c0, %c0_0] : memref<8x32xf32, #tpu.memory_space<vmem>>, vector<8x32xf32>
    %c0_1 = arith.constant 0 : index
    %c0_2 = arith.constant 0 : index
    %1 = vector.load %arg2[%c0_1, %c0_2] : memref<8x32xf32, #tpu.memory_space<vmem>>, vector<8x32xf32>
    %c0_3 = arith.constant 0 : index
    %c0_4 = arith.constant 0 : index
    %2 = vector.load %arg3[%c0_3, %c0_4] : memref<8x32xf32, #tpu.memory_space<vmem>>, vector<8x32xf32>
    %3 = arith.subf %0, %1 : vector<8x32xf32>
    %4 = arith.subf %0, %2 : vector<8x32xf32>
    %5 = arith.mulf %3, %3 : vector<8x32xf32>
    %cst = arith.constant dense<0.000000e+00> : vector<8xf32>
    %6 = vector.multi_reduction <add>, %5, %cst [1] : vector<8x32xf32> to vector<8xf32>
    %7 = vector.shape_cast %6 : vector<8xf32> to vector<8x1xf32>
    %8 = arith.mulf %4, %4 : vector<8x32xf32>
    %cst_5 = arith.constant dense<0.000000e+00> : vector<8xf32>
    %9 = vector.multi_reduction <add>, %8, %cst_5 [1] : vector<8x32xf32> to vector<8xf32>
    %10 = vector.shape_cast %9 : vector<8xf32> to vector<8x1xf32>
    %11 = arith.subf %7, %10 : vector<8x1xf32>
    %cst_6 = arith.constant 1.000000e+00 : f32
    %12 = vector.broadcast %cst_6 : f32 to vector<8x1xf32>
    %13 = arith.addf %11, %12 : vector<8x1xf32>
    %cst_7 = arith.constant 0.000000e+00 : f32
    %14 = vector.broadcast %cst_7 : f32 to vector<8x1xf32>
    %15 = arith.maximumf %13, %14 : vector<8x1xf32>
    %c0_i32 = arith.constant 0 : i32
    %16 = arith.cmpi eq, %arg0, %c0_i32 : i32
    %true = arith.constant true
    %17 = arith.xori %16, %true : i1
    %18 = arith.extui %17 : i1 to i32
    %c0_i32_8 = arith.constant 0 : i32
    %19 = arith.cmpi ne, %18, %c0_i32_8 : i32
    scf.if %19 {
      %c0_10 = arith.constant 0 : index
      %c0_11 = arith.constant 0 : index
      %22 = vector.load %arg4[%c0_10, %c0_11] : memref<8x1xf32, #tpu.memory_space<vmem>>, vector<8x1xf32>
      tpu.vector_store %arg4[%c0_10, %c0_11], %15 {strides = array<i32>} : memref<8x1xf32, #tpu.memory_space<vmem>>, vector<8x1xf32>,
    } else {
    }
    %20 = arith.extui %16 : i1 to i32
    %c0_i32_9 = arith.constant 0 : i32
    %21 = arith.cmpi ne, %20, %c0_i32_9 : i32
    scf.if %21 {
      %c8_i32 = arith.constant 8 : i32
      %22 = arith.muli %arg0, %c8_i32 : i32
      %23 = tpu.iota {dimensions = array<i32: 0>} : vector<8x1xi32>
      %24 = vector.broadcast %22 : i32 to vector<8x1xi32>
      %25 = arith.addi %24, %23 : vector<8x1xi32>
      %c8_i32_10 = arith.constant 8 : i32
      %26 = vector.broadcast %c8_i32_10 : i32 to vector<8x1xi32>
      %27 = arith.cmpi slt, %25, %26 : vector<8x1xi32>
      %cst_11 = arith.constant 0.000000e+00 : f32
      %28 = vector.broadcast %cst_11 : f32 to vector<8x1xf32>
      %29 = arith.select %27, %15, %28 : vector<8x1xi1>, vector<8x1xf32>
      %c0_12 = arith.constant 0 : index
      %c0_13 = arith.constant 0 : index
      %30 = vector.load %arg4[%c0_12, %c0_13] : memref<8x1xf32, #tpu.memory_space<vmem>>, vector<8x1xf32>
      tpu.vector_store %arg4[%c0_12, %c0_13], %29 {strides = array<i32>} : memref<8x1xf32, #tpu.memory_space<vmem>>, vector<8x1xf32>,
    } else {
    }
    return
  }
  func.func @transform_0(%arg0: i32) -> (i32, i32) {
    %c0_i32 = arith.constant 0 : i32
    %c0_i32_0 = arith.constant 0 : i32
    return %arg0, %c0_i32 : i32, i32
  }
  func.func @transform_1(%arg0: i32) -> (i32, i32) {
    %c0_i32 = arith.constant 0 : i32
    %c0_i32_0 = arith.constant 0 : i32
    return %arg0, %c0_i32 : i32, i32
  }
  func.func @transform_2(%arg0: i32) -> (i32, i32) {
    %c0_i32 = arith.constant 0 : i32
    %c0_i32_0 = arith.constant 0 : i32
    return %arg0, %c0_i32 : i32, i32
  }
  func.func @transform_3(%arg0: i32) -> (i32, i32) {
    %c0_i32 = arith.constant 0 : i32
    %c0_i32_0 = arith.constant 0 : i32
    return %arg0, %c0_i32 : i32, i32
  }
}

</mosaic_0001>

<llo_original>
// kernel: tpu_custom_call.1
$region0: #{tpu_custom_call.1}
  #allocation0 [shape = 'u32[]', space=smem, size = 0x4, offset = 0x4, fixed_abs, tag = 'smem constant byte address 0x4 - core index']
  #allocation1 [shape = 'u32[144,128]{1,0:T(1,128)}', space=vmem, size = 0x12000, scoped, tag = 'internal scratch']
  %s0 = inlined_call_operand.hbm [shape: f32[8,32], index: 0, kind: input, shape index: {}]
  %s1 = inlined_call_operand.hbm [shape: f32[8,32], index: 1, kind: input, shape index: {}]
  %s2 = inlined_call_operand.hbm [shape: f32[8,32], index: 2, kind: input, shape index: {}]
  %s3 = inlined_call_operand.vmem [shape: f32[8,1], index: 3, kind: output, shape index: {}]
  %s4 = sld [smem:[#allocation0]]
  $region42: #{tpu_custom_call.1} parent=0
    _
  %s6 = ssub.s32 1, %s4
  %s7 = scalar_select 0, %s6, %s4
  $region1: #{tpu_custom_call.1} parent=0
    #allocation2 [shape = 'u8[4096]{0}', space=vmem, size = 0x1000, scoped, tag = 'input window, operand 0, single buffered']
    #allocation3 [shape = 's32[1]{0}', space=sflag, size = 0x4, scoped, tag = 'scoped memory for tpu_custom_call.1']
    #allocation4 [shape = 'u8[4096]{0}', space=vmem, size = 0x1000, scoped, tag = 'input window, operand 1, single buffered']
    #allocation5 [shape = 's32[1]{0}', space=sflag, size = 0x4, scoped, tag = 'scoped memory for tpu_custom_call.1']
    #allocation6 [shape = 'u8[4096]{0}', space=vmem, size = 0x1000, scoped, tag = 'input window, operand 2, single buffered']
    %8 = vsyncpa [#allocation3], 0
    %9 = vsyncpa [#allocation5], 0
    // Predicated region
    $region2: #{tpu_custom_call.1} parent=1 // pred_check
      _
    $region3: #{tpu_custom_call.1} parent=1 // pred_check_branch
      %11 = sbr.rel (0) target = $region5
    $region4: #{tpu_custom_call.1} parent=1 // pred_region
      %s13 = ssub.s32 128, 128
      %14 = vsyncadd [#allocation3], %s13
      %s16 = sshll.u32 [#allocation2], 4
      %s17 = int_to_ptr.vmem [resolvable:$true] %s16
      %19 = dma.hbm_to_vmem [thread:$0]  %s0, 128, %s17, [#allocation3]
    $region5: #{tpu_custom_call.1} parent=1 // pred_fallthru
      _
    // Predicated region
    $region6: #{tpu_custom_call.1} parent=1 // pred_check
      _
    $region7: #{tpu_custom_call.1} parent=1 // pred_check_branch
      %21 = sbr.rel (0) target = $region9
    $region8: #{tpu_custom_call.1} parent=1 // pred_region
      %s23 = ssub.s32 128, 128
      %24 = vsyncadd [#allocation5], %s23
      %s26 = sshll.u32 [#allocation4], 4
      %s27 = int_to_ptr.vmem [resolvable:$true] %s26
      %29 = dma.hbm_to_vmem [thread:$0]  %s1, 128, %s27, [#allocation5]
    $region9: #{tpu_custom_call.1} parent=1 // pred_fallthru
      _
    // Predicated region
    $region10: #{tpu_custom_call.1} parent=1 // pred_check
      _
    $region11: #{tpu_custom_call.1} parent=1 // pred_check_branch
      %31 = sbr.rel (0) target = $region13
    $region12: #{tpu_custom_call.1} parent=1 // pred_region
      %s33 = ssub.s32 128, 128
      %34 = vsyncadd [#allocation5], %s33
      %s36 = sshll.u32 [#allocation6], 4
      %s37 = int_to_ptr.vmem [resolvable:$true] %s36
      %39 = dma.hbm_to_vmem [thread:$0]  %s2, 128, %s37, [#allocation5]
    $region13: #{tpu_custom_call.1} parent=1 // pred_fallthru
      _
    // Predicated region
    $region14: #{tpu_custom_call.1} parent=1 // pred_check
      _
    $region15: #{tpu_custom_call.1} parent=1 // pred_check_branch
      %41 = sbr.rel (0) target = $region17
    $region16: #{tpu_custom_call.1} parent=1 // pred_region
      %42 = dma.done [#allocation3], 128
    $region17: #{tpu_custom_call.1} parent=1 // pred_fallthru
      _
    // Predicated region
    $region18: #{tpu_custom_call.1} parent=1 // pred_check
      _
    $region19: #{tpu_custom_call.1} parent=1 // pred_check_branch
      %44 = sbr.rel (0) target = $region21
    $region20: #{tpu_custom_call.1} parent=1 // pred_region
      %45 = dma.done [#allocation5], 128
    $region21: #{tpu_custom_call.1} parent=1 // pred_fallthru
      _
    // Predicated region
    $region22: #{tpu_custom_call.1} parent=1 // pred_check
      _
    $region23: #{tpu_custom_call.1} parent=1 // pred_check_branch
      %47 = sbr.rel (0) target = $region25
    $region24: #{tpu_custom_call.1} parent=1 // pred_region
      %48 = dma.done [#allocation5], 128
    $region25: #{tpu_custom_call.1} parent=1 // pred_fallthru
      _
    %v49 = vld [vmem:[#allocation2] sm:$0xff]
    %v50 = vld [vmem:[#allocation4] sm:$0xff]
    %v51 = vld [vmem:[#allocation6] sm:$0xff]
    %v52 = vsub.f32 %v49, %v50
    %v53 = vsub.f32 %v49, %v51
    %v54 = vmul.f32 %v52, %v52
    %vm55 = vcmask 261120
    %v56 = vsel %vm55, %v54, 0.0
    %57 = vadd.xlane.f32.xlu0 %v56
    %v58 = vpop.xlane.xlu0 %57
    %v59 = vmul.f32 %v53, %v53
    %v60 = vsel %vm55, %v59, 0.0
    %61 = vadd.xlane.f32.xlu0 %v60
    %v62 = vpop.xlane.xlu0 %61
    %v63 = vsub.f32 %v58, %v62
    %v64 = vadd.f32 %v63, 1.0
    %v65 = vmax.f32 %v64, 0.0
    %p66 = scmp.eq.s32.totalorder 0, 0
    %p67 = scmp.ne.s32.totalorder 0, 0
    // Predicated region
    $region26: #{tpu_custom_call.1} parent=1 // pred_check
      %p68 = pneg %p67
    $region27: #{tpu_custom_call.1} parent=1 // pred_check_branch
      %70 = sbr.rel (%p68) target = $region29
    $region28: #{tpu_custom_call.1} parent=1 // pred_region
      %vm71 = vcmask 7168
      %72 = vst.msk [vmem:[%s3] sm:$0xff] %vm71, %v65
    $region29: #{tpu_custom_call.1} parent=1 // pred_fallthru
      _
    // Predicated region
    $region30: #{tpu_custom_call.1} parent=1 // pred_check
      %p73 = pneg %p66
    $region31: #{tpu_custom_call.1} parent=1 // pred_check_branch
      %75 = sbr.rel (%p73) target = $region33
    $region32: #{tpu_custom_call.1} parent=1 // pred_region
      %s76 = smul.u32 0, 8
      %v77 = vlaneseq
      %v78 = vshrl.u32 %v77, 7
      %v79 = vstv %s76
      %v80 = vadd.s32 %v79, %v78
      %vm81 = vcmp.lt.s32.totalorder %v80, 8
      %v82 = vsel %vm81, %v65, 0.0
      %vm83 = vcmask 7168
      %84 = vst.msk [vmem:[%s3] sm:$0xff] %vm83, %v82
    $region33: #{tpu_custom_call.1} parent=1 // pred_fallthru
      _
    // Predicated region
    $region34: #{tpu_custom_call.1} parent=1 // pred_check
      _
    $region35: #{tpu_custom_call.1} parent=1 // pred_check_branch
      %86 = sbr.rel (0) target = $region37
    $region36: #{tpu_custom_call.1} parent=1 // pred_region
      _
    $region37: #{tpu_custom_call.1} parent=1 // pred_fallthru
      _
    // Predicated region
    $region38: #{tpu_custom_call.1} parent=1 // pred_check
      _
    $region39: #{tpu_custom_call.1} parent=1 // pred_check_branch
      %88 = sbr.rel (0) target = $region41
    $region40: #{tpu_custom_call.1} parent=1 // pred_region
      _
    $region41: #{tpu_custom_call.1} parent=1 // pred_fallthru
      _
    %89 = vsyncpa [#allocation3], 1
    %90 = vsyncpa [#allocation5], 1

</llo_original>
